<compile_context>
chip_gen: v6e
topology: v6e:2x2x1
jax: 0.10.0
libtpu: 0.0.40
codegen_flags: <defaults>
</compile_context>

<pallas_src>
import functools

import jax
import jax.numpy as jnp
from jax import lax
from jax.experimental import pallas as pl
from jax.experimental.pallas import tpu as pltpu

NEG_BIG = -9e15


def _leaky_relu(x, alpha):
    return jnp.where(x > 0, x, alpha * x)


def _elu(x):
    # expm1 only sees non-positive values -> no inf on the discarded branch.
    return jnp.where(x > 0, x, jnp.expm1(jnp.minimum(x, 0.0)))


def _recip(x):
    # EUP vrcp (free bundle slot) + one Newton-Raphson step to recover ~f32 accuracy.
    r = pl.reciprocal(x, approx=True)
    return r * (2.0 - x * r)


# --------------------------------------------------------------------------
# Stage 1: fused multi-head projection.
#   Wh_all = x @ W_all                  (tq, H*nhid)  one wide MXU matmul
#   scores = (Wh_all @ A_pair).T        (2H, tq)      lane-dense transposed store
#     row h   = query score Wh_h . a1_h ;  row H+h = key score Wh_h . a2_h
# --------------------------------------------------------------------------
def _proj_kernel(x_ref, wall_ref, apair_ref, wh_ref, sT_ref):
    wh = jnp.dot(x_ref[...], wall_ref[...], preferred_element_type=jnp.float32)
    wh_ref[...] = wh.astype(wh_ref.dtype)
    s = jnp.dot(wh, apair_ref[...], preferred_element_type=jnp.float32)  # (tq, 2H)
    sT_ref[...] = s.T                                   # tiny XLU transpose


# --------------------------------------------------------------------------
# Stage 2: per-head masked attention over all keys for a tile of query rows,
# fused with the output-layer projection (the (tq, H*nhid) concat slab never
# leaves VMEM).
# --------------------------------------------------------------------------
def _attend_heads_kernel(sqT_ref, skT_ref, adj_ref, wh_ref, wout_ref, aoutp_ref,
                         whout_ref, s2T_ref, *, alpha, nhid, H):
    tq = sqT_ref.shape[1]
    hdim = wh_ref.shape[1]

    # Mask hoisted out of the head loop: one select per tile, reused as a bias.
    bias = jnp.where(adj_ref[...] > 0, 0.0, NEG_BIG)            # (tq, N) f32
    sq = sqT_ref[...].T                                         # (tq, 2H), tiny
    lane = lax.broadcasted_iota(jnp.int32, (1, hdim), 1)

    h_cat = jnp.zeros((tq, hdim), jnp.float32)
    for h in range(H):                                          # static unroll, H small
        s_query = sq[:, h:h + 1]                                # (tq, 1)
        s_key = skT_ref[H + h:H + h + 1, :]                     # (1, N), sublane slice
        e = _leaky_relu(s_query + s_key, alpha) + bias
        m = jnp.max(e, axis=1, keepdims=True)
        p = jnp.exp(e - m)                                      # unnormalized probs
        inv = _recip(jnp.sum(p, axis=1, keepdims=True))
        # Full-width matmul against the whole (N, hdim) block: no lane-offset slice
        # (= relayout copy) of the big Wh operand; hdim <= 128 so MXU passes match.
        num = jnp.dot(p.astype(wh_ref.dtype), wh_ref[...],
                      preferred_element_type=jnp.float32)       # (tq, hdim)
        head_mask = (lane >= h * nhid) & (lane < (h + 1) * nhid)
        h_cat = jnp.where(head_mask, num * inv, h_cat)          # keep head-h lanes

    h_cat = _elu(h_cat)                                         # concat=True -> elu
    wh_out = jnp.dot(h_cat, wout_ref[...], preferred_element_type=jnp.float32)
    whout_ref[...] = wh_out                                     # (tq, nclass)
    s2 = jnp.dot(wh_out, aoutp_ref[...], preferred_element_type=jnp.float32)
    s2T_ref[...] = s2.T                                         # (2, tq) lane-dense


# --------------------------------------------------------------------------
# Stage 3: output attention layer (concat=False) fused with F.elu + log_softmax.
# --------------------------------------------------------------------------
def _attend_out_kernel(sqT_ref, skT_ref, adj_ref, whout_ref, out_ref, *, alpha):
    bias = jnp.where(adj_ref[...] > 0, 0.0, NEG_BIG)            # (tq, N)
    sq = sqT_ref[...].T                                         # (tq, 2)
    e = _leaky_relu(sq[:, 0:1] + skT_ref[1:2, :], alpha) + bias
    m = jnp.max(e, axis=1, keepdims=True)
    p = jnp.exp(e - m)
    inv = _recip(jnp.sum(p, axis=1, keepdims=True))
    num = jnp.dot(p, whout_ref[...], preferred_element_type=jnp.float32)
    y = _elu(num * inv)                                         # F.elu in GAT.forward
    z = y - jnp.max(y, axis=1, keepdims=True)
    lse = jnp.log(jnp.sum(jnp.exp(z), axis=1, keepdims=True))
    out_ref[...] = z - lse                                      # log_softmax(dim=1)


def gat_forward(x, adj, W_heads, a_heads, W_out, a_out, *, alpha,
                wh_dtype=jnp.bfloat16, tq_att=256, tq_proj=512):
    """Pallas-backed GAT forward (eval mode; dropout is identity)."""
    N, nfeat = x.shape
    H, _, nhid = W_heads.shape
    hdim = H * nhid
    nclass = W_out.shape[1]

    # ---- query tiles + padding (arbitrary N; padded keys stay masked via adj=0,
    #      padded query rows are dropped on return) ----
    if N <= tq_att:
        tq_att = N
    Np = ((N + tq_att - 1) // tq_att) * tq_att
    if Np % tq_proj != 0:
        tq_proj = tq_att
    if Np != N:
        x = jnp.pad(x, ((0, Np - N), (0, 0)))
        adj = jnp.pad(adj, ((0, Np - N), (0, Np - N)))
    nt_att = Np // tq_att
    nt_proj = Np // tq_proj

    # adjacency is only a mask -> stream as int8 (4x less DMA than f32)
    adj_i8 = (adj > 0).astype(jnp.int8)

    # ---- fold the H per-head weights into one wide matmul operand ----
    # W_all[:, h*nhid:(h+1)*nhid] == W_heads[h]
    W_all = jnp.transpose(W_heads, (1, 0, 2)).reshape(nfeat, hdim).astype(wh_dtype)
    x_c = x.astype(wh_dtype)
    # Block-diagonal attention-vector matrix:  scores = Wh_all @ A_pair,
    #   scores[:, h] = Wh_h . a1_h (query),  scores[:, H+h] = Wh_h . a2_h (key)
    a1 = a_heads[:, 0, :nhid]
    a2 = a_heads[:, 0, nhid:]
    eyeH = jnp.eye(H, dtype=jnp.float32)
    A1 = (a1[:, :, None] * eyeH[:, None, :]).reshape(hdim, H)
    A2 = (a2[:, :, None] * eyeH[:, None, :]).reshape(hdim, H)
    A_pair = jnp.concatenate([A1, A2], axis=1)                            # (hdim, 2H)
    A_out_pair = jnp.stack([a_out[0, :nclass], a_out[0, nclass:]], axis=1)  # (nclass, 2)

    # Explicit VMEM budget: v5e default scoped VMEM is 16 MiB, v7x physical is 64 MiB.
    par = pltpu.CompilerParams(dimension_semantics=("parallel",),
                               vmem_limit_bytes=64 * 1024 * 1024)
    f32 = jnp.float32

    # ---- stage 1: Wh_all + per-head scores (scores stored lane-dense, transposed) ----
    Wh_all, s1T = pl.pallas_call(
        _proj_kernel,
        out_shape=(jax.ShapeDtypeStruct((Np, hdim), wh_dtype),
                   jax.ShapeDtypeStruct((2 * H, Np), f32)),
        grid=(nt_proj,),
        in_specs=[pl.BlockSpec((tq_proj, nfeat), lambda i: (i, 0)),
                  pl.BlockSpec((nfeat, hdim), lambda i: (0, 0)),
                  pl.BlockSpec((hdim, 2 * H), lambda i: (0, 0))],
        out_specs=(pl.BlockSpec((tq_proj, hdim), lambda i: (i, 0)),
                   pl.BlockSpec((2 * H, tq_proj), lambda i: (0, i))),
        compiler_params=par,
    )(x_c, W_all, A_pair)

    # ---- stage 2: head attention + output-layer projection (fused) ----
    Wh_out, s2T = pl.pallas_call(
        functools.partial(_attend_heads_kernel, alpha=alpha, nhid=nhid, H=H),
        out_shape=(jax.ShapeDtypeStruct((Np, nclass), f32),
                   jax.ShapeDtypeStruct((2, Np), f32)),
        grid=(nt_att,),
        in_specs=[pl.BlockSpec((2 * H, tq_att), lambda i: (0, i)),   # query-side scores
                  pl.BlockSpec((2 * H, Np), lambda i: (0, 0)),       # key-side scores
                  pl.BlockSpec((tq_att, Np), lambda i: (i, 0)),      # adj mask (int8)
                  pl.BlockSpec((Np, hdim), lambda i: (0, 0)),        # Wh (resident)
                  pl.BlockSpec((hdim, nclass), lambda i: (0, 0)),
                  pl.BlockSpec((nclass, 2), lambda i: (0, 0))],
        out_specs=(pl.BlockSpec((tq_att, nclass), lambda i: (i, 0)),
                   pl.BlockSpec((2, tq_att), lambda i: (0, i))),
        compiler_params=par,
    )(s1T, s1T, adj_i8, Wh_all, W_out.astype(f32), A_out_pair)

    # ---- stage 3: output attention + elu + log_softmax ----
    out = pl.pallas_call(
        functools.partial(_attend_out_kernel, alpha=alpha),
        out_shape=jax.ShapeDtypeStruct((Np, nclass), f32),
        grid=(nt_att,),
        in_specs=[pl.BlockSpec((2, tq_att), lambda i: (0, i)),
                  pl.BlockSpec((2, Np), lambda i: (0, 0)),
                  pl.BlockSpec((tq_att, Np), lambda i: (i, 0)),
                  pl.BlockSpec((Np, nclass), lambda i: (0, 0))],
        out_specs=pl.BlockSpec((tq_att, nclass), lambda i: (i, 0)),
        compiler_params=par,
    )(s2T, s2T, adj_i8, Wh_out)
    return out[:N]


# ---------------- pure-JAX reference (for verification) ----------------
def _layer_ref(x, adj, W, a, alpha, concat):
    nout = W.shape[1]
    Wh = x @ W
    Wh1 = Wh @ a[:nout].reshape(nout, 1)
    Wh2 = Wh @ a[nout:].reshape(nout, 1)
    e = _leaky_relu(Wh1 + Wh2.T, alpha)
    e = jnp.where(adj > 0, e, NEG_BIG)
    att = jax.nn.softmax(e, axis=1)
    hp = att @ Wh
    return _elu(hp) if concat else hp


def gat_ref(x, adj, W_heads, a_heads, W_out, a_out, *, alpha):
    H = W_heads.shape[0]
    outs = [_layer_ref(x, adj, W_heads[h], a_heads[h, 0], alpha, True)
            for h in range(H)]
    xc = jnp.concatenate(outs, axis=1)
    y = _elu(_layer_ref(xc, adj, W_out, a_out[0], alpha, False))
    return jax.nn.log_softmax(y, axis=1)


# ---------------- deterministic parameter init (xavier uniform, gain=1.414) ----
def _xavier(key, shape, fan_in, fan_out, gain=1.414):
    bound = gain * (6.0 / (fan_in + fan_out)) ** 0.5
    return jax.random.uniform(key, shape, jnp.float32, -bound, bound)


if __name__ == "__main__":
    # Small shapes: N=16 nodes, nfeat=32, nhid=16, nheads=4, nclass=8
    N, nfeat, nhid, nheads, nclass = 16, 32, 16, 4, 8
    alpha = 0.2  # LeakyReLU slope; dropout=0.6 (inactive in eval mode)

    key = jax.random.PRNGKey(0)
    kx, kadj, kw, ka, kwo, kao = jax.random.split(key, 6)

    x = jax.random.normal(kx, (N, nfeat), jnp.float32)

    # symmetric random adjacency with self loops
    r = jax.random.uniform(kadj, (N, N))
    adj = (r < 0.3).astype(jnp.float32)
    adj = jnp.maximum(adj, adj.T)
    adj = jnp.maximum(adj, jnp.eye(N, dtype=jnp.float32))

    # stacked per-head parameters
    W_heads = _xavier(kw, (nheads, nfeat, nhid), nfeat, nhid)
    a_heads = _xavier(ka, (nheads, 1, 2 * nhid), 2 * nhid, 1)
    W_out = _xavier(kwo, (nhid * nheads, nclass), nhid * nheads, nclass)
    a_out = _xavier(kao, (1, 2 * nclass), 2 * nclass, 1)

    ref = gat_ref(x, adj, W_heads, a_heads, W_out, a_out, alpha=alpha)

    # f32 path: strict semantics check against the pure-JAX reference.
    out_f32 = gat_forward(x, adj, W_heads, a_heads, W_out, a_out,
                          alpha=alpha, wh_dtype=jnp.float32)
    out_f32 = jax.block_until_ready(out_f32)
    assert out_f32.shape == (N, nclass)
    assert bool(jnp.allclose(out_f32, ref, atol=1e-4, rtol=1e-4)), "f32 mismatch vs reference"

    # bf16 path (recommended production config on v5e/v6e/v7x): looser numeric check.
    out_bf16 = gat_forward(x, adj, W_heads, a_heads, W_out, a_out,
                           alpha=alpha, wh_dtype=jnp.bfloat16)
    out_bf16 = jax.block_until_ready(out_bf16)
    assert out_bf16.shape == (N, nclass)
    assert bool(jnp.max(jnp.abs(out_bf16 - ref)) < 0.15), "bf16 path diverged from reference"

    print("KERNEL_OK")
</pallas_src>

<mosaic_0001>
module attributes {stable_mosaic.version = 11 : i64} {
  func.func @_proj_kernel(%arg0: i32, %arg1: memref<16x32xf32, #tpu.memory_space<vmem>>, %arg2: memref<32x64xf32, #tpu.memory_space<vmem>>, %arg3: memref<64x8xf32, #tpu.memory_space<vmem>>, %arg4: memref<16x64xf32, #tpu.memory_space<vmem>>, %arg5: memref<8x16xf32, #tpu.memory_space<vmem>>) attributes {dimension_semantics = [#tpu.dimension_semantics<parallel>], iteration_bounds = array<i64: 1>, scalar_prefetch = 0 : i64, scratch_operands = 0 : i64, tpu.core_type = #tpu.core_type<tc>, window_params = [{transform_indices = @transform_0, window_bounds = array<i64: 16, 32>}, {pipeline_mode = #tpu.pipeline_mode<synchronous>, transform_indices = @transform_1, window_bounds = array<i64: 32, 64>}, {pipeline_mode = #tpu.pipeline_mode<synchronous>, transform_indices = @transform_2, window_bounds = array<i64: 64, 8>}, {transform_indices = @transform_3, window_bounds = array<i64: 16, 64>}, {transform_indices = @transform_4, window_bounds = array<i64: 8, 16>}]} {
    %c0 = arith.constant 0 : index
    %c0_0 = arith.constant 0 : index
    %0 = vector.load %arg1[%c0, %c0_0] : memref<16x32xf32, #tpu.memory_space<vmem>>, vector<16x32xf32>
    %c0_1 = arith.constant 0 : index
    %c0_2 = arith.constant 0 : index
    %1 = vector.load %arg2[%c0_1, %c0_2] : memref<32x64xf32, #tpu.memory_space<vmem>>, vector<32x64xf32>
    %cst = arith.constant dense<0.000000e+00> : vector<16x64xf32>
    %2 = tpu.matmul %0, %1, %cst {dimension_numbers = #tpu.dot_dimension_numbers<[1], [0], [0], [1], [0, 0, 1, 1], [], []>} : vector<16x32xf32>, vector<32x64xf32>, vector<16x64xf32> -> vector<16x64xf32>
    %c0_3 = arith.constant 0 : index
    %c0_4 = arith.constant 0 : index
    %3 = vector.load %arg4[%c0_3, %c0_4] : memref<16x64xf32, #tpu.memory_space<vmem>>, vector<16x64xf32>
    tpu.vector_store %arg4[%c0_3, %c0_4], %2 {strides = array<i32>} : memref<16x64xf32, #tpu.memory_space<vmem>>, vector<16x64xf32>,
    %c0_5 = arith.constant 0 : index
    %c0_6 = arith.constant 0 : index
    %4 = vector.load %arg3[%c0_5, %c0_6] : memref<64x8xf32, #tpu.memory_space<vmem>>, vector<64x8xf32>
    %cst_7 = arith.constant dense<0.000000e+00> : vector<16x8xf32>
    %5 = tpu.matmul %2, %4, %cst_7 {dimension_numbers = #tpu.dot_dimension_numbers<[1], [0], [0], [1], [0, 0, 1, 1], [], []>} : vector<16x64xf32>, vector<64x8xf32>, vector<16x8xf32> -> vector<16x8xf32>
    %6 = tpu.transpose %5, [1, 0] : vector<16x8xf32> -> vector<8x16xf32>
    %c0_8 = arith.constant 0 : index
    %c0_9 = arith.constant 0 : index
    %7 = vector.load %arg5[%c0_8, %c0_9] : memref<8x16xf32, #tpu.memory_space<vmem>>, vector<8x16xf32>
    tpu.vector_store %arg5[%c0_8, %c0_9], %6 {strides = array<i32>} : memref<8x16xf32, #tpu.memory_space<vmem>>, vector<8x16xf32>,
    return
  }
  func.func @transform_0(%arg0: i32) -> (i32, i32) {
    %c0_i32 = arith.constant 0 : i32
    %c0_i32_0 = arith.constant 0 : i32
    return %arg0, %c0_i32 : i32, i32
  }
  func.func @transform_1(%arg0: i32) -> (i32, i32) {
    %c0_i32 = arith.constant 0 : i32
    %c0_i32_0 = arith.constant 0 : i32
    %c0_i32_1 = arith.constant 0 : i32
    return %c0_i32, %c0_i32_0 : i32, i32
  }
  func.func @transform_2(%arg0: i32) -> (i32, i32) {
    %c0_i32 = arith.constant 0 : i32
    %c0_i32_0 = arith.constant 0 : i32
    %c0_i32_1 = arith.constant 0 : i32
    return %c0_i32, %c0_i32_0 : i32, i32
  }
  func.func @transform_3(%arg0: i32) -> (i32, i32) {
    %c0_i32 = arith.constant 0 : i32
    %c0_i32_0 = arith.constant 0 : i32
    return %arg0, %c0_i32 : i32, i32
  }
  func.func @transform_4(%arg0: i32) -> (i32, i32) {
    %c0_i32 = arith.constant 0 : i32
    %c0_i32_0 = arith.constant 0 : i32
    return %c0_i32, %arg0 : i32, i32
  }
}

</mosaic_0001>

<llo_original>
// kernel: tpu_custom_call.1
$region0: #{tpu_custom_call.1}
  #allocation0 [shape = 'u32[]', space=smem, size = 0x4, offset = 0x4, fixed_abs, tag = 'smem constant byte address 0x4 - core index']
  #allocation1 [shape = 'u32[144,128]{1,0:T(1,128)}', space=vmem, size = 0x12000, scoped, tag = 'internal scratch']
  %s0 = inlined_call_operand.vmem [shape: f32[16,32], index: 0, kind: input, shape index: {}]
  %s1 = inlined_call_operand.vmem [shape: f32[32,64], index: 1, kind: input, shape index: {}]
  %s2 = inlined_call_operand.vmem [shape: f32[64,8], index: 2, kind: input, shape index: {}]
  %s3 = inlined_call_operand.hbm [shape: f32[16,64], index: 3, kind: output, shape index: {0}]
  %s4 = inlined_call_operand.hbm [shape: f32[8,16], index: 4, kind: output, shape index: {1}]
  %5 = xla_tuple %s3, %s4
  %s6 = sld [smem:[#allocation0]]
  $region30: #{tpu_custom_call.1} parent=0
    _
  %s8 = ssub.s32 1, %s6
  %s9 = scalar_select 0, %s8, %s6
  $region1: #{tpu_custom_call.1} parent=0
    #allocation2 [shape = 'u8[8192]{0}', space=vmem, size = 0x2000, scoped, tag = 'output window, operand 0, single buffered']
    #allocation3 [shape = 's32[1]{0}', space=sflag, size = 0x4, scoped, tag = 'scoped memory for tpu_custom_call.1']
    #allocation4 [shape = 'u8[4096]{0}', space=vmem, size = 0x1000, scoped, tag = 'output window, operand 1, single buffered']
    #allocation5 [shape = 's32[1]{0}', space=sflag, size = 0x4, scoped, tag = 'scoped memory for tpu_custom_call.1']
    %10 = vsyncpa [#allocation3], 0
    %11 = vsyncpa [#allocation5], 0
    // Predicated region
    $region2: #{tpu_custom_call.1} parent=1 // pred_check
      _
    $region3: #{tpu_custom_call.1} parent=1 // pred_check_branch
      %13 = sbr.rel (0) target = $region5
    $region4: #{tpu_custom_call.1} parent=1 // pred_region
      _
    $region5: #{tpu_custom_call.1} parent=1 // pred_fallthru
      _
    // Predicated region
    $region6: #{tpu_custom_call.1} parent=1 // pred_check
      _
    $region7: #{tpu_custom_call.1} parent=1 // pred_check_branch
      %15 = sbr.rel (0) target = $region9
    $region8: #{tpu_custom_call.1} parent=1 // pred_region
      _
    $region9: #{tpu_custom_call.1} parent=1 // pred_fallthru
      _
    // Predicated region
    $region10: #{tpu_custom_call.1} parent=1 // pred_check
      _
    $region11: #{tpu_custom_call.1} parent=1 // pred_check_branch
      %17 = sbr.rel (0) target = $region13
    $region12: #{tpu_custom_call.1} parent=1 // pred_region
      _
    $region13: #{tpu_custom_call.1} parent=1 // pred_fallthru
      _
    %v18 = vld [vmem:[%s0] sm:$0xff]
    %v19 = vld [vmem:[%s0 + $0x8] sm:$0xff]
    %v20 = vld [vmem:[%s1] sm:$0xff]
    %v21 = vld [vmem:[%s1 + $0x8] sm:$0xff]
    %v22 = vld [vmem:[%s1 + $0x10] sm:$0xff]
    %v23 = vld [vmem:[%s1 + $0x18] sm:$0xff]
    %vm24 = vcmask 261120
    %v26 = vsel %vm24, %v18, 0
    %v29 = vsel %vm24, %v19, 0
    %31 = vmatprep.subr.mxu0 0.0
    %32 = vmatpush1.msra.mxu0 0.0
    %33 = vmatprep.subr.mxu0 0.0
    %34 = vmatpush1.msra.mxu0 0.0
    %35 = vmatprep.subr.mxu0 0.0
    %36 = vmatpush1.msra.mxu0 0.0
    %37 = vmatprep.subr.mxu0 0.0
    %38 = vmatpush1.msra.mxu0 0.0
    %39 = vmatprep.subr.mxu0 0.0
    %40 = vmatpush1.msra.mxu0 0.0
    %41 = vmatprep.subr.mxu0 0.0
    %42 = vmatpush1.msra.mxu0 0.0
    %43 = vmatprep.subr.mxu0 0.0
    %44 = vmatpush1.msra.mxu0 0.0
    %45 = vmatprep.subr.mxu0 0.0
    %46 = vmatpush1.msra.mxu0 0.0
    %47 = vmatprep.subr.mxu0 0.0
    %48 = vmatpush1.msra.mxu0 0.0
    %49 = vmatprep.subr.mxu0 0.0
    %50 = vmatpush1.msra.mxu0 0.0
    %51 = vmatprep.subr.mxu0 0.0
    %52 = vmatpush1.msra.mxu0 0.0
    %53 = vmatprep.subr.mxu0 0.0
    %54 = vmatpush1.msra.mxu0 0.0
    %55 = vmatprep.subr.mxu0 0.0
    %56 = vmatpush1.msra.mxu0 %v23
    %57 = vmatprep.subr.mxu0 0.0
    %58 = vmatpush1.msra.mxu0 %v22
    %59 = vmatprep.subr.mxu0 0.0
    %60 = vmatpush1.msra.mxu0 %v21
    %61 = vmatprep.subr.mxu0 0.0
    %62 = vmatpush1.msra.mxu0 %v20
    %63 = vmatprep.subr.mxu0 0.0
    %64 = vmatpush2.msra.mxu0 0.0
    %65 = vmatprep.subr.mxu0 0.0
    %66 = vmatpush2.msra.mxu0 0.0
    %67 = vmatprep.subr.mxu0 0.0
    %68 = vmatpush2.msra.mxu0 0.0
    %69 = vmatprep.subr.mxu0 0.0
    %70 = vmatpush2.msra.mxu0 0.0
    %71 = vmatprep.subr.mxu0 0.0
    %72 = vmatpush2.msra.mxu0 0.0
    %73 = vmatprep.subr.mxu0 0.0
    %74 = vmatpush2.msra.mxu0 0.0
    %75 = vmatprep.subr.mxu0 0.0
    %76 = vmatpush2.msra.mxu0 0.0
    %77 = vmatprep.subr.mxu0 0.0
    %78 = vmatpush2.msra.mxu0 0.0
    %79 = vmatprep.subr.mxu0 0.0
    %80 = vmatpush2.msra.mxu0 0.0
    %81 = vmatprep.subr.mxu0 0.0
    %82 = vmatpush2.msra.mxu0 0.0
    %83 = vmatprep.subr.mxu0 0.0
    %84 = vmatpush2.msra.mxu0 0.0
    %85 = vmatprep.subr.mxu0 0.0
    %86 = vmatpush2.msra.mxu0 0.0
    %87 = vmatprep.subr.mxu0 0.0
    %88 = vmatpush2.msra.mxu0 0.0
    %89 = vmatprep.subr.mxu0 0.0
    %90 = vmatpush2.msra.mxu0 0.0
    %91 = vmatprep.subr.mxu0 0.0
    %92 = vmatpush2.msra.mxu0 0.0
    %93 = vmatprep.subr.mxu0 0.0
    %94 = vmatpush2.msra.mxu0 0.0
    %95 = vmatprep.mubr.f32.mxu0 0.0
    %96 = vmatmul.mubr.f32.gmra.mxu0 %v26
    %v97 = vpop.f32.mrf.mxu0
    %v98 = vadd.f32 0.0, %v97
    %v99 = vpop.f32.mrf.mxu0
    %100 = vmatprep.mubr.f32.mxu0 0.0
    %101 = vmatmul.mubr.f32.gmra.mxu0 %v29
    %v102 = vpop.f32.mrf.mxu0
    %v103 = vadd.f32 0.0, %v102
    %v104 = vpop.f32.mrf.mxu0
    %105 = vdwg.mxu0
    %vm106 = vcmask 523264
    %107 = vst.msk [vmem:[#allocation2] sm:$0xff] %vm106, %v98
    %108 = vst.msk [vmem:[#allocation2 + $0x8] sm:$0xff] %vm106, %v103
    %v109 = vld [vmem:[%s2] sm:$0xff]
    %v110 = vld [vmem:[%s2 + $0x8] sm:$0xff]
    %v111 = vld [vmem:[%s2 + $0x10] sm:$0xff]
    %v112 = vld [vmem:[%s2 + $0x18] sm:$0xff]
    %v113 = vld [vmem:[%s2 + $0x20] sm:$0xff]
    %v114 = vld [vmem:[%s2 + $0x28] sm:$0xff]
    %v115 = vld [vmem:[%s2 + $0x30] sm:$0xff]
    %v116 = vld [vmem:[%s2 + $0x38] sm:$0xff]
    %v118 = vsel %vm106, %v98, 0
    %v121 = vsel %vm106, %v103, 0
    %123 = vmatprep.subr.mxu0 0.0
    %124 = vmatpush1.msra.mxu0 0.0
    %125 = vmatprep.subr.mxu0 0.0
    %126 = vmatpush1.msra.mxu0 0.0
    %127 = vmatprep.subr.mxu0 0.0
    %128 = vmatpush1.msra.mxu0 0.0
    %129 = vmatprep.subr.mxu0 0.0
    %130 = vmatpush1.msra.mxu0 0.0
    %131 = vmatprep.subr.mxu0 0.0
    %132 = vmatpush1.msra.mxu0 0.0
    %133 = vmatprep.subr.mxu0 0.0
    %134 = vmatpush1.msra.mxu0 0.0
    %135 = vmatprep.subr.mxu0 0.0
    %136 = vmatpush1.msra.mxu0 0.0
    %137 = vmatprep.subr.mxu0 0.0
    %138 = vmatpush1.msra.mxu0 0.0
    %139 = vmatprep.subr.mxu0 0.0
    %140 = vmatpush1.msra.mxu0 %v116
    %141 = vmatprep.subr.mxu0 0.0
    %142 = vmatpush1.msra.mxu0 %v115
    %143 = vmatprep.subr.mxu0 0.0
    %144 = vmatpush1.msra.mxu0 %v114
    %145 = vmatprep.subr.mxu0 0.0
    %146 = vmatpush1.msra.mxu0 %v113
    %147 = vmatprep.subr.mxu0 0.0
    %148 = vmatpush1.msra.mxu0 %v112
    %149 = vmatprep.subr.mxu0 0.0
    %150 = vmatpush1.msra.mxu0 %v111
    %151 = vmatprep.subr.mxu0 0.0
    %152 = vmatpush1.msra.mxu0 %v110
    %153 = vmatprep.subr.mxu0 0.0
    %154 = vmatpush1.msra.mxu0 %v109
    %155 = vmatprep.subr.mxu0 0.0
    %156 = vmatpush2.msra.mxu0 0.0
    %157 = vmatprep.subr.mxu0 0.0
    %158 = vmatpush2.msra.mxu0 0.0
    %159 = vmatprep.subr.mxu0 0.0
    %160 = vmatpush2.msra.mxu0 0.0
    %161 = vmatprep.subr.mxu0 0.0
    %162 = vmatpush2.msra.mxu0 0.0
    %163 = vmatprep.subr.mxu0 0.0
    %164 = vmatpush2.msra.mxu0 0.0
    %165 = vmatprep.subr.mxu0 0.0
    %166 = vmatpush2.msra.mxu0 0.0
    %167 = vmatprep.subr.mxu0 0.0
    %168 = vmatpush2.msra.mxu0 0.0
    %169 = vmatprep.subr.mxu0 0.0
    %170 = vmatpush2.msra.mxu0 0.0
    %171 = vmatprep.subr.mxu0 0.0
    %172 = vmatpush2.msra.mxu0 0.0
    %173 = vmatprep.subr.mxu0 0.0
    %174 = vmatpush2.msra.mxu0 0.0
    %175 = vmatprep.subr.mxu0 0.0
    %176 = vmatpush2.msra.mxu0 0.0
    %177 = vmatprep.subr.mxu0 0.0
    %178 = vmatpush2.msra.mxu0 0.0
    %179 = vmatprep.subr.mxu0 0.0
    %180 = vmatpush2.msra.mxu0 0.0
    %181 = vmatprep.subr.mxu0 0.0
    %182 = vmatpush2.msra.mxu0 0.0
    %183 = vmatprep.subr.mxu0 0.0
    %184 = vmatpush2.msra.mxu0 0.0
    %185 = vmatprep.subr.mxu0 0.0
    %186 = vmatpush2.msra.mxu0 0.0
    %187 = vmatprep.mubr.f32.mxu0 0.0
    %188 = vmatmul.mubr.f32.gmra.mxu0 %v118
    %v189 = vpop.f32.mrf.mxu0
    %v190 = vadd.f32 0.0, %v189
    %v191 = vpop.f32.mrf.mxu0
    %192 = vmatprep.mubr.f32.mxu0 0.0
    %193 = vmatmul.mubr.f32.gmra.mxu0 %v121
    %v194 = vpop.f32.mrf.mxu0
    %v195 = vadd.f32 0.0, %v194
    %v196 = vpop.f32.mrf.mxu0
    %197 = vdwg.mxu0
    %198 = vxpose.xlu0.b32.start [1/16] %v190, 128
    %199 = vxpose.xlu0.b32.cont [2/16] %v195, 128
    %200 = vxpose.xlu0.b32.cont [3/16] 0.0, 128
    %201 = vxpose.xlu0.b32.cont [4/16] 0.0, 128
    %202 = vxpose.xlu0.b32.cont [5/16] 0.0, 128
    %203 = vxpose.xlu0.b32.cont [6/16] 0.0, 128
    %204 = vxpose.xlu0.b32.cont [7/16] 0.0, 128
    %205 = vxpose.xlu0.b32.cont [8/16] 0.0, 128
    %206 = vxpose.xlu0.b32.cont [9/16] 0.0, 128
    %207 = vxpose.xlu0.b32.cont [10/16] 0.0, 128
    %208 = vxpose.xlu0.b32.cont [11/16] 0.0, 128
    %209 = vxpose.xlu0.b32.cont [12/16] 0.0, 128
    %210 = vxpose.xlu0.b32.cont [13/16] 0.0, 128
    %211 = vxpose.xlu0.b32.cont [14/16] 0.0, 128
    %212 = vxpose.xlu0.b32.cont [15/16] 0.0, 128
    %213 = vxpose.xlu0.b32.end [16/16] 0.0, 128
    %v214 = vpop.trf.xlu0
    %v215 = vpop.trf.xlu0
    %v216 = vpop.trf.xlu0
    %v217 = vpop.trf.xlu0
    %v218 = vpop.trf.xlu0
    %v219 = vpop.trf.xlu0
    %v220 = vpop.trf.xlu0
    %v221 = vpop.trf.xlu0
    %v222 = vpop.trf.xlu0
    %v223 = vpop.trf.xlu0
    %v224 = vpop.trf.xlu0
    %v225 = vpop.trf.xlu0
    %v226 = vpop.trf.xlu0
    %v227 = vpop.trf.xlu0
    %v228 = vpop.trf.xlu0
    %v229 = vpop.trf.xlu0
    %vm230 = vcmask 130048
    %231 = vst.msk [vmem:[#allocation4] sm:$0xff] %vm230, %v214
    // Predicated region
    $region14: #{tpu_custom_call.1} parent=1 // pred_check
      _
    $region15: #{tpu_custom_call.1} parent=1 // pred_check_branch
      %233 = sbr.rel (0) target = $region17
    $region16: #{tpu_custom_call.1} parent=1 // pred_region
      %s235 = ssub.s32 256, 256
      %236 = vsyncadd [#allocation3], %s235
      %s237 = sshll.u32 [#allocation2], 4
      %s238 = int_to_ptr.vmem [resolvable:$true] %s237
      %243 = dma.vmem_to_hbm [thread:$0]  %s238, 256, %s3, [#allocation3], 128, 128, 8
    $region17: #{tpu_custom_call.1} parent=1 // pred_fallthru
      _
    // Predicated region
    $region18: #{tpu_custom_call.1} parent=1 // pred_check
      _
    $region19: #{tpu_custom_call.1} parent=1 // pred_check_branch
      %245 = sbr.rel (0) target = $region21
    $region20: #{tpu_custom_call.1} parent=1 // pred_region
      %s247 = ssub.s32 128, 128
      %248 = vsyncadd [#allocation5], %s247
      %s250 = sshll.u32 [#allocation4], 4
      %s251 = int_to_ptr.vmem [resolvable:$true] %s250
      %253 = dma.vmem_to_hbm [thread:$0]  %s251, 128, %s4, [#allocation5]
    $region21: #{tpu_custom_call.1} parent=1 // pred_fallthru
      _
    // Predicated region
    $region22: #{tpu_custom_call.1} parent=1 // pred_check
      _
    $region23: #{tpu_custom_call.1} parent=1 // pred_check_branch
      %255 = sbr.rel (0) target = $region25
    $region24: #{tpu_custom_call.1} parent=1 // pred_region
      %256 = dma.done [#allocation3], 256
    $region25: #{tpu_custom_call.1} parent=1 // pred_fallthru
      _
    // Predicated region
    $region26: #{tpu_custom_call.1} parent=1 // pred_check
      _
    $region27: #{tpu_custom_call.1} parent=1 // pred_check_branch
      %258 = sbr.rel (0) target = $region29
    $region28: #{tpu_custom_call.1} parent=1 // pred_region
      %259 = dma.done [#allocation5], 128
    $region29: #{tpu_custom_call.1} parent=1 // pred_fallthru
      _
    %260 = vsyncpa [#allocation3], 1
    %261 = vsyncpa [#allocation5], 1

</llo_original>
